<compile_context>
chip_gen: v7x
topology: tpu7x:2x2x1
jax: 0.10.0
libtpu: 0.0.40
codegen_flags: <defaults>
</compile_context>

<pallas_src>
import functools

import jax
import jax.numpy as jnp
from jax.experimental import pallas as pl
from jax.experimental.pallas import tpu as pltpu


def _round_up(n, m):
    return ((n + m - 1) // m) * m


def _critique_kernel(layout, mm_dtype, x_ref, p_ref, out_ref):
    """Fused MLP: all dense layers of one batch tile in a single kernel invocation.

    layout: static tuple of (w_off, w_rows, w_cols, b_off, b_cols) per layer describing
            where each parameter block lives inside the packed slab `p_ref` (already in
            mm_dtype).  Hidden layers store W as (in_pad, out_pad); the final layer
            stores W as (1, d_last_pad) (PyTorch orientation) so the output can be
            produced lane-dense.
    """
    h = x_ref[...].astype(jnp.float32)                        # (bt, pose_dim), f32
    num_layers = len(layout)
    for i, (w_off, w_rows, w_cols, b_off, b_cols) in enumerate(layout):
        w = p_ref[w_off:w_off + w_rows, 0:w_cols]             # static full-lane slice (mm_dtype)
        b = p_ref[b_off:b_off + 1, 0:b_cols].astype(jnp.float32)   # (1, out_pad), broadcasts
        if i < num_layers - 1:
            h = jnp.dot(h.astype(mm_dtype), w,
                        preferred_element_type=jnp.float32) + b
            h = jnp.maximum(h, 0.0)                           # ReLU in f32; padded cols stay 0
        else:
            # Final (d_last -> 1) layer, computed transposed so batch lands on lanes:
            # (1, d_last_pad) contracted with (bt, d_last_pad) on the feature dim -> (1, bt).
            logits = jax.lax.dot_general(
                w, h.astype(mm_dtype),
                dimension_numbers=(((1,), (1,)), ((), ())),
                preferred_element_type=jnp.float32) + b       # b is (1, 1)
            y = jax.nn.sigmoid(logits)                        # (1, bt), f32
            out_ref[...] = y[None].astype(out_ref.dtype)      # (1, 1, bt) lane-dense store


def _pack_params(weights, biases, param_dtype):
    """Pack all layer parameters into one (rows, lanes) slab (param_dtype) + static layout.

    weights[i]: (in_i, out_i) (PyTorch weight transposed); biases[i]: (1, out_i) or (out_i,).
    Hidden blocks are zero-padded to 128-lane widths (and 128-row contraction dims for
    layers after the first) so every kernel slice is full-lane.  The final layer's weight
    is stored in PyTorch (1, d_last) orientation (lane-padded) for the lane-dense output.
    """
    num_layers = len(weights)
    blocks, layout_shapes = [], []
    for i, (w, b) in enumerate(zip(weights, biases)):
        w = jnp.asarray(w, jnp.float32)
        b = jnp.reshape(jnp.asarray(b, jnp.float32), (1, -1))
        d_in, d_out = int(w.shape[0]), int(w.shape[1])
        last = (i == num_layers - 1)
        if last:
            w = w.T                                            # (1, d_last)
            w_rows, w_cols = 1, _round_up(d_in, 128)
            b_cols = 1
        else:
            # First layer contracts the raw pose_dim input; later layers contract the
            # lane-padded activation width of the previous layer.
            w_rows = d_in if i == 0 else _round_up(d_in, 128)
            w_cols = _round_up(d_out, 128)
            b_cols = w_cols
        w_pad = jnp.zeros((w_rows, w_cols), jnp.float32)
        w_pad = w_pad.at[:w.shape[0], :w.shape[1]].set(w)
        b_pad = jnp.zeros((1, max(b_cols, b.shape[1])), jnp.float32)
        b_pad = b_pad.at[:, :b.shape[1]].set(b)                # padded bias cols are exactly 0
        blocks.append(w_pad)
        blocks.append(b_pad)
        layout_shapes.append((w_rows, w_cols, b_cols))

    lanes = _round_up(max(blk.shape[1] for blk in blocks), 128)
    offsets, row = [], 0
    for blk in blocks:
        offsets.append(row)
        row += _round_up(blk.shape[0], 8)
    total_rows = _round_up(max(row, 8), 8)

    slab = jnp.zeros((total_rows, lanes), jnp.float32)
    for off, blk in zip(offsets, blocks):
        slab = slab.at[off:off + blk.shape[0], 0:blk.shape[1]].set(blk)
    slab = slab.astype(param_dtype)                            # bf16 by default: half the DMA,
                                                               # no per-step weight cast
    layout = tuple(
        (offsets[2 * i], layout_shapes[i][0], layout_shapes[i][1],
         offsets[2 * i + 1], layout_shapes[i][2])
        for i in range(num_layers))
    return slab, layout


def critique_forward(x, weights, biases, *, batch_tile=1024, matmul_dtype=jnp.bfloat16):
    """Run the Critique MLP via one fused Pallas kernel, tiled over the batch axis."""
    B, pose_dim = x.shape
    slab, layout = _pack_params(weights, biases, matmul_dtype)

    # Dtype-aware minimum sublane tile (f32: 8 rows, bf16: 16 rows).
    min_rows = 16 if x.dtype == jnp.bfloat16 else 8
    bt = max(min_rows, _round_up(min(int(batch_tile), B), min_rows))
    # Guarantee >= 2 grid steps whenever B allows it, so v7x's 2 TensorCores both get
    # work under dimension_semantics=("parallel",).
    if B > min_rows:
        bt = min(bt, _round_up(pl.cdiv(B, 2), min_rows))
    num_tiles = pl.cdiv(B, bt)

    kernel = functools.partial(_critique_kernel, layout, matmul_dtype)

    itemsize = jnp.dtype(x.dtype).itemsize
    cost = pl.CostEstimate(
        flops=2 * B * sum(int(w.shape[0]) * int(w.shape[1]) for w in weights),
        transcendentals=B,                       # one sigmoid per output element
        bytes_accessed=int(B * pose_dim * itemsize + B * itemsize
                           + slab.size * jnp.dtype(slab.dtype).itemsize),
    )

    out = pl.pallas_call(
        kernel,
        out_shape=jax.ShapeDtypeStruct((num_tiles, 1, bt), x.dtype),
        grid_spec=pltpu.PrefetchScalarGridSpec(
            num_scalar_prefetch=0,
            grid=(num_tiles,),
            in_specs=[
                pl.BlockSpec((bt, pose_dim), lambda i: (i, 0)),    # batch tile of x
                pl.BlockSpec(slab.shape, lambda i: (0, 0)),        # grid-invariant params
            ],
            out_specs=pl.BlockSpec((1, 1, bt), lambda i: (i, 0, 0)),  # lane-dense output
        ),
        compiler_params=pltpu.CompilerParams(
            dimension_semantics=("parallel",),
        ),
        cost_estimate=cost,
    )(x, slab)

    # (num_tiles, 1, bt) -> (B, 1); padded rows of the ragged last tile are dropped here.
    return out.reshape(num_tiles * bt, 1)[:B]


def init_critique_params(key, pose_dim, dense_layer_sizes):
    """Deterministic synthetic parameters with the same shapes as the PyTorch module.

    Layer i: PyTorch weight (out, in), bias (out,).  We store the transposed weight
    (in, out) and the bias as (1, out) for 2-D TPU friendliness.
    """
    sizes = [pose_dim] + list(dense_layer_sizes) + [1]
    weights, biases = [], []
    for i in range(len(sizes) - 1):
        fan_in, fan_out = sizes[i], sizes[i + 1]
        key, kw, kb = jax.random.split(key, 3)
        bound = 1.0 / jnp.sqrt(fan_in)
        w = jax.random.uniform(kw, (fan_in, fan_out), jnp.float32, -bound, bound)
        b = jax.random.uniform(kb, (1, fan_out), jnp.float32, -bound, bound)
        weights.append(w)
        biases.append(b)
    return weights, biases


def critique_reference(x, weights, biases):
    """Pure-JAX f32 reference for correctness checking."""
    h = x.astype(jnp.float32)
    n = len(weights)
    for i, (w, b) in enumerate(zip(weights, biases)):
        h = h @ w + jnp.reshape(b, (1, -1))
        h = jnp.maximum(h, 0.0) if i < n - 1 else jax.nn.sigmoid(h)
    return h.astype(x.dtype)


if __name__ == "__main__":
    # Shapes implied by the module: poses of joint_count=16 joints with joint_dim=2
    # -> pose_dim = 32; hidden sizes [64, 32]; batch intentionally not a multiple of
    # the tile so the grid has 2 steps (one per v7x TensorCore) with a ragged tail.
    joint_count, joint_dim = 16, 2
    pose_dim = joint_count * joint_dim
    dense_layer_sizes = [64, 32]
    batch = 200

    key = jax.random.PRNGKey(0)
    key, kx = jax.random.split(key)
    x = jax.random.normal(kx, (batch, pose_dim), jnp.float32)

    weights, biases = init_critique_params(key, pose_dim, dense_layer_sizes)

    out = critique_forward(x, weights, biases)          # bf16 matmul operands, f32 accum
    out = jax.block_until_ready(out)

    ref = critique_reference(x, weights, biases)
    assert out.shape == (batch, 1), out.shape
    # bf16 weights/operands (f32 accumulation): loosen tolerance vs the f32 reference.
    assert jnp.allclose(out, ref, atol=2e-2, rtol=2e-2), (out, ref)

    # Sanity-check the full-precision path as well.
    out_f32 = jax.block_until_ready(
        critique_forward(x, weights, biases, matmul_dtype=jnp.float32))
    assert jnp.allclose(out_f32, ref, atol=1e-5, rtol=1e-5), (out_f32, ref)

    print("KERNEL_OK")
</pallas_src>

<mosaic_0001>
module attributes {stable_mosaic.version = 11 : i64} {
  func.func @_critique_kernel(%arg0: i32, %arg1: memref<104x32xf32, #tpu.memory_space<vmem>>, %arg2: memref<192x128xbf16, #tpu.memory_space<vmem>>, %arg3: memref<1x1x104xf32, #tpu.memory_space<vmem>>) attributes {dimension_semantics = [#tpu.dimension_semantics<parallel>], iteration_bounds = array<i64: 2>, scalar_prefetch = 0 : i64, scratch_operands = 0 : i64, tpu.core_type = #tpu.core_type<tc>, window_params = [{transform_indices = @transform_0, window_bounds = array<i64: 104, 32>}, {pipeline_mode = #tpu.pipeline_mode<synchronous>, transform_indices = @transform_1, window_bounds = array<i64: 192, 128>}, {transform_indices = @transform_2, window_bounds = array<i64: 1, 1, 104>}]} {
    %c0 = arith.constant 0 : index
    %c0_0 = arith.constant 0 : index
    %0 = vector.load %arg1[%c0, %c0_0] : memref<104x32xf32, #tpu.memory_space<vmem>>, vector<104x32xf32>
    %c0_1 = arith.constant 0 : index
    %c0_2 = arith.constant 0 : index
    %1 = vector.load %arg2[%c0_1, %c0_2] : memref<192x128xbf16, #tpu.memory_space<vmem>>, vector<32x128xbf16>
    %c32 = arith.constant 32 : index
    %c0_3 = arith.constant 0 : index
    %2 = vector.load %arg2[%c32, %c0_3] : memref<192x128xbf16, #tpu.memory_space<vmem>>, vector<1x128xbf16>
    %3 = arith.extf %2 : vector<1x128xbf16> to vector<1x128xf32>
    %4 = arith.truncf %0 : vector<104x32xf32> to vector<104x32xbf16>
    %cst = arith.constant dense<0.000000e+00> : vector<104x128xf32>
    %5 = tpu.matmul %4, %1, %cst {dimension_numbers = #tpu.dot_dimension_numbers<[1], [0], [0], [1], [0, 0, 1, 1], [], []>} : vector<104x32xbf16>, vector<32x128xbf16>, vector<104x128xf32> -> vector<104x128xf32>
    %6 = vector.broadcast %3 : vector<1x128xf32> to vector<104x128xf32>
    %7 = arith.addf %5, %6 : vector<104x128xf32>
    %cst_4 = arith.constant 0.000000e+00 : f32
    %8 = vector.broadcast %cst_4 : f32 to vector<104x128xf32>
    %9 = arith.maximumf %7, %8 : vector<104x128xf32>
    %c40 = arith.constant 40 : index
    %c0_5 = arith.constant 0 : index
    %10 = vector.load %arg2[%c40, %c0_5] : memref<192x128xbf16, #tpu.memory_space<vmem>>, vector<128x128xbf16>
    %c168 = arith.constant 168 : index
    %c0_6 = arith.constant 0 : index
    %11 = vector.load %arg2[%c168, %c0_6] : memref<192x128xbf16, #tpu.memory_space<vmem>>, vector<1x128xbf16>
    %12 = arith.extf %11 : vector<1x128xbf16> to vector<1x128xf32>
    %13 = arith.truncf %9 : vector<104x128xf32> to vector<104x128xbf16>
    %cst_7 = arith.constant dense<0.000000e+00> : vector<104x128xf32>
    %14 = tpu.matmul %13, %10, %cst_7 {dimension_numbers = #tpu.dot_dimension_numbers<[1], [0], [0], [1], [0, 0, 1, 1], [], []>} : vector<104x128xbf16>, vector<128x128xbf16>, vector<104x128xf32> -> vector<104x128xf32>
    %15 = vector.broadcast %12 : vector<1x128xf32> to vector<104x128xf32>
    %16 = arith.addf %14, %15 : vector<104x128xf32>
    %cst_8 = arith.constant 0.000000e+00 : f32
    %17 = vector.broadcast %cst_8 : f32 to vector<104x128xf32>
    %18 = arith.maximumf %16, %17 : vector<104x128xf32>
    %c176 = arith.constant 176 : index
    %c0_9 = arith.constant 0 : index
    %19 = vector.load %arg2[%c176, %c0_9] : memref<192x128xbf16, #tpu.memory_space<vmem>>, vector<1x128xbf16>
    %c184 = arith.constant 184 : index
    %c0_10 = arith.constant 0 : index
    %20 = vector.load %arg2[%c184, %c0_10] : memref<192x128xbf16, #tpu.memory_space<vmem>>, vector<1x1xbf16>
    %21 = arith.extf %20 : vector<1x1xbf16> to vector<1x1xf32>
    %22 = arith.truncf %18 : vector<104x128xf32> to vector<104x128xbf16>
    %cst_11 = arith.constant dense<0.000000e+00> : vector<1x104xf32>
    %23 = tpu.matmul %19, %22, %cst_11 {dimension_numbers = #tpu.dot_dimension_numbers<[1], [1], [0], [0], [0, 0, 1, 0], [], []>} : vector<1x128xbf16>, vector<104x128xbf16>, vector<1x104xf32> -> vector<1x104xf32>
    %24 = vector.broadcast %21 : vector<1x1xf32> to vector<1x104xf32>
    %25 = arith.addf %23, %24 : vector<1x104xf32>
    %26 = arith.negf %25 : vector<1x104xf32>
    %27 = math.exp %26 : vector<1x104xf32>
    %cst_12 = arith.constant 1.000000e+00 : f32
    %28 = vector.broadcast %cst_12 : f32 to vector<1x104xf32>
    %29 = arith.addf %28, %27 : vector<1x104xf32>
    %30 = arith.divf %28, %29 : vector<1x104xf32>
    %31 = vector.shape_cast %30 : vector<1x104xf32> to vector<1x1x104xf32>
    %c0_13 = arith.constant 0 : index
    %c0_14 = arith.constant 0 : index
    %c0_15 = arith.constant 0 : index
    %32 = vector.load %arg3[%c0_13, %c0_14, %c0_15] : memref<1x1x104xf32, #tpu.memory_space<vmem>>, vector<1x1x104xf32>
    tpu.vector_store %arg3[%c0_13, %c0_14, %c0_15], %31 {strides = array<i32>} : memref<1x1x104xf32, #tpu.memory_space<vmem>>, vector<1x1x104xf32>,
    return
  }
  func.func @transform_0(%arg0: i32) -> (i32, i32) {
    %c0_i32 = arith.constant 0 : i32
    %c0_i32_0 = arith.constant 0 : i32
    return %arg0, %c0_i32 : i32, i32
  }
  func.func @transform_1(%arg0: i32) -> (i32, i32) {
    %c0_i32 = arith.constant 0 : i32
    %c0_i32_0 = arith.constant 0 : i32
    %c0_i32_1 = arith.constant 0 : i32
    return %c0_i32, %c0_i32_0 : i32, i32
  }
  func.func @transform_2(%arg0: i32) -> (i32, i32, i32) {
    %c0_i32 = arith.constant 0 : i32
    %c0_i32_0 = arith.constant 0 : i32
    %c0_i32_1 = arith.constant 0 : i32
    return %arg0, %c0_i32, %c0_i32_0 : i32, i32, i32
  }
}

</mosaic_0001>

<llo_original>
// kernel: tpu_custom_call.1
$region0: #{tpu_custom_call.1}
  #allocation0 [shape = 'u32[]', space=smem, size = 0x4, offset = 0x4, fixed_abs, tag = 'smem constant byte address 0x4 - core index']
  #allocation1 [shape = 'u32[144,128]{1,0:T(1,128)}', space=vmem, size = 0x12000, scoped, tag = 'internal scratch']
  %s0 = inlined_call_operand.vmem [shape: f32[200,32], index: 0, kind: input, shape index: {}]
  %s1 = inlined_call_operand.vmem [shape: bf16[192,128], index: 1, kind: input, shape index: {}]
  %s2 = inlined_call_operand.hbm [shape: f32[2,1,104], index: 2, kind: output, shape index: {}]
  %s3 = sld [smem:[#allocation0]]
  $region41: #{tpu_custom_call.1} parent=0
    _
  %s5 = ssub.s32 1, %s3
  %s6 = scalar_select 0, %s5, %s3
  $region1: #{tpu_custom_call.1} parent=0
    #allocation2 [shape = 'u8[1024]{0}', space=vmem, size = 0x400, scoped, tag = 'output window, operand 0']
    #allocation3 [shape = 's32[2]{0}', space=sflag, size = 0x8, scoped, tag = 'scoped memory for tpu_custom_call.1']
    %7 = vsyncpa [#allocation3], 0
    %s8 = scalar_lea.sflag [#allocation3], 1
    %9 = vsyncpa %s8, 0
    loop: start=0, step=1, limit=4
    $region2: #{tpu_custom_call.1} parent=1 // loop_pre_header
      _
    $region3: #{tpu_custom_call.1} parent=1 // loop_header
      %s11 = sphi 0, %s15
      %p12 = scmp.ge.s32.totalorder %s11, 4
      %s21 = sphi 0, %s23
      %s24 = sphi 0, %s21
      %s25 = sphi 0, %s24
      %s41 = sphi 0, %s25
      %s45 = sphi 0, %s45
      %s47 = sphi 0, %s45
      %s48 = sphi 0, %s47
      %s62 = sphi 0, %s48
      %s68 = sphi 0, %s70
      %s71 = sphi 0, %s68
      %s72 = sphi 0, %s71
      %s88 = sphi 0, %s72
    $region4: #{tpu_custom_call.1} parent=1 // loop_header_branch
      %14 = sbr.rel (%p12) target = $region8
    $region5: #{tpu_custom_call.1} parent=1 // loop_body
      %s16 = ssub.s32 %s11, 1
      %s17 = ssub.s32 %s11, 2
      %s18 = sadd.s32 %s11, 1
      %s19 = ssub.s32 %s11, %s18
      %p20 = scmp.eq.s32.totalorder %s19, 0
      %s22 = sadd.s32 %s21, 1
      %s23 = scalar_select %p20, %s21, %s22
      %p26 = pneg %p20
      %p27 = scmp.eq.s32.totalorder %s11, 1
      %p28 = por %p26, %p27
      %p29 = scmp.ne.s32.totalorder %s21, %s24
      %p30 = scmp.eq.s32.totalorder %s11, 0
      %p31 = por %p29, %p30
      %p32 = scmp.ne.s32.totalorder %s21, %s24
      %p33 = scmp.eq.s32.totalorder %s16, 1
      %p34 = por %p32, %p33
      %p35 = scmp.ne.s32.totalorder %s24, %s25
      %p36 = scmp.eq.s32.totalorder %s16, 0
      %p37 = por %p35, %p36
      %p38 = scmp.ne.s32.totalorder %s24, %s25
      %p39 = scmp.eq.s32.totalorder %s17, 1
      %p40 = por %p38, %p39
      %p42 = scmp.ne.s32.totalorder %s25, %s41
      %p43 = scmp.eq.s32.totalorder %s17, 0
      %p44 = por %p42, %p43
      %s46 = sadd.s32 %s45, 1
      %p49 = scmp.eq.s32.totalorder %s11, 1
      %p50 = scmp.ne.s32.totalorder %s45, %s47
      %p51 = scmp.eq.s32.totalorder %s11, 0
      %p52 = por %p50, %p51
      %p53 = scmp.ne.s32.totalorder %s45, %s47
      %p54 = scmp.eq.s32.totalorder %s16, 1
      %p55 = por %p53, %p54
      %p56 = scmp.ne.s32.totalorder %s47, %s48
      %p57 = scmp.eq.s32.totalorder %s16, 0
      %p58 = por %p56, %p57
      %p59 = scmp.ne.s32.totalorder %s47, %s48
      %p60 = scmp.eq.s32.totalorder %s17, 1
      %p61 = por %p59, %p60
      %p63 = scmp.ne.s32.totalorder %s48, %s62
      %p64 = scmp.eq.s32.totalorder %s17, 0
      %p65 = por %p63, %p64
      %s66 = ssub.s32 %s11, %s18
      %p67 = scmp.eq.s32.totalorder %s66, 0
      %s69 = sadd.s32 %s68, 1
      %s70 = scalar_select %p67, %s68, %s69
      %p73 = pneg %p67
      %p74 = scmp.eq.s32.totalorder %s11, 1
      %p75 = por %p73, %p74
      %p76 = scmp.ne.s32.totalorder %s68, %s71
      %p77 = scmp.eq.s32.totalorder %s11, 0
      %p78 = por %p76, %p77
      %p79 = scmp.ne.s32.totalorder %s68, %s71
      %p80 = scmp.eq.s32.totalorder %s16, 1
      %p81 = por %p79, %p80
      %p82 = scmp.ne.s32.totalorder %s71, %s72
      %p83 = scmp.eq.s32.totalorder %s16, 0
      %p84 = por %p82, %p83
      %p85 = scmp.ne.s32.totalorder %s71, %s72
      %p86 = scmp.eq.s32.totalorder %s17, 1
      %p87 = por %p85, %p86
      %p89 = scmp.ne.s32.totalorder %s72, %s88
      %p90 = scmp.eq.s32.totalorder %s17, 0
      %p91 = por %p89, %p90
      %p92 = scmp.le.s32.totalorder 1, %s11
      %p93 = scmp.lt.s32.totalorder %s11, 3
      %p94 = pnand %p92, %p93
      %p95 = pneg %p94
      // Predicated region
      $region9: #{tpu_custom_call.1} parent=5 // pred_check
        _
      $region10: #{tpu_custom_call.1} parent=5 // pred_check_branch
        %97 = sbr.rel (%p94) target = $region12
      $region11: #{tpu_custom_call.1} parent=5 // pred_region
        %s98 = ssub.s32 %s11, 1
        // Predicated region
        $region13: #{tpu_custom_call.1} parent=11 // pred_check
          %p99 = pneg %p58
        $region14: #{tpu_custom_call.1} parent=11 // pred_check_branch
          %101 = sbr.rel (%p99) target = $region16
        $region15: #{tpu_custom_call.1} parent=11 // pred_region
          _
        $region16: #{tpu_custom_call.1} parent=11 // pred_fallthru
          _
      $region12: #{tpu_custom_call.1} parent=5 // pred_fallthru
        _
      %p102 = scmp.lt.s32.totalorder %s11, 2
      // Predicated region
      $region17: #{tpu_custom_call.1} parent=5 // pred_check
        %p103 = pneg %p102
      $region18: #{tpu_custom_call.1} parent=5 // pred_check_branch
        %105 = sbr.rel (%p103) target = $region20
      $region19: #{tpu_custom_call.1} parent=5 // pred_region
        // Predicated region
        $region21: #{tpu_custom_call.1} parent=19 // pred_check
          %p106 = pneg %p31
        $region22: #{tpu_custom_call.1} parent=19 // pred_check_branch
          %108 = sbr.rel (%p106) target = $region24
        $region23: #{tpu_custom_call.1} parent=19 // pred_region
          %s109 = smul.u32 13, %s11
          %s110 = ssub.s32 25, %s109
          %p111 = scmp.lt.s32.totalorder %s110, 13
          %s112 = scalar_select %p111, %s110, 13
          %s113 = smul.u32 128, %s112
          %p114 = scmp.lt.s32.totalorder %s109, 24
          %s115 = scalar_select %p114, %s109, 24
          %s116 = smul.addr %s115, 8
          %s117 = scalar_lea.vmem %s0, %s116
          %s118 = smul.u32 13, %s11
          %s119 = ssub.s32 25, %s118
          %p120 = scmp.lt.s32.totalorder %s119, 13
          %s121 = scalar_select %p120, %s119, 13
          %s122 = smul.u32 128, %s121
        $region24: #{tpu_custom_call.1} parent=19 // pred_fallthru
          _
      $region20: #{tpu_custom_call.1} parent=5 // pred_fallthru
        _
      %p123 = scmp.le.s32.totalorder 1, %s11
      %p124 = scmp.lt.s32.totalorder %s11, 3
      %p125 = pnand %p123, %p124
      %p126 = pneg %p125
      // Predicated region
      $region25: #{tpu_custom_call.1} parent=5 // pred_check
        _
      $region26: #{tpu_custom_call.1} parent=5 // pred_check_branch
        %128 = sbr.rel (%p125) target = $region28
      $region27: #{tpu_custom_call.1} parent=5 // pred_region
        %s129 = ssub.s32 %s11, 1
        %s130 = smul.u32 13, %s16
        %s131 = ssub.s32 25, %s130
        %p132 = scmp.lt.s32.totalorder %s131, 13
        %s133 = scalar_select %p132, %s131, 13
        %s134 = smul.u32 128, %s133
        %p135 = scmp.lt.s32.totalorder %s130, 24
        %s136 = scalar_select %p135, %s130, 24
        %s137 = smul.addr %s136, 8
        %s138 = scalar_lea.vmem %s0, %s137
        %p139 = pneg %p37
        %p140 = pneg %p34
        %p141 = pneg %p58
        %p142 = pneg %p55
        %p143 = pneg %p84
        %p144 = pneg %p81
        %s145 = sand.u32 %s71, 1
        %s146 = scalar_lea.sflag [#allocation3], %s145
        %s147 = sand.u32 %s71, 1
        %s148 = scalar_lea.vmem [#allocation2], %s147
        %s149 = smul.u32 13, %s16
        %s150 = ssub.s32 25, %s149
        %p151 = scmp.lt.s32.totalorder %s150, 13
        %s152 = scalar_select %p151, %s150, 13
        %s153 = smul.u32 128, %s152
        %p154 = scmp.lt.s32.totalorder %s149, 24
        %s155 = scalar_select %p154, %s149, 24
        %s156 = smul.addr %s155, 8
        %s157 = scalar_lea.vmem %s0, %s156
        %s158 = smul.u32 13, %s16
        %s159 = ssub.s32 25, %s158
        %p160 = scmp.lt.s32.totalorder %s159, 13
        %s161 = scalar_select %p160, %s159, 13
        %s162 = smul.u32 128, %s161
        %v164 = vld [vmem:[%s157] sm:$0xff]
        %v165 = vld [vmem:[%s157 + $0x8] sm:$0xff]
        %v166 = vld [vmem:[%s157 + $0x10] sm:$0xff]
        %v167 = vld [vmem:[%s157 + $0x18] sm:$0xff]
        %v168 = vld [vmem:[%s157 + $0x20] sm:$0xff]
        %v169 = vld [vmem:[%s157 + $0x28] sm:$0xff]
        %v170 = vld [vmem:[%s157 + $0x30] sm:$0xff]
        %v171 = vld [vmem:[%s157 + $0x38] sm:$0xff]
        %v172 = vld [vmem:[%s157 + $0x40] sm:$0xff]
        %v173 = vld [vmem:[%s157 + $0x48] sm:$0xff]
        %v174 = vld [vmem:[%s157 + $0x50] sm:$0xff]
        %v175 = vld [vmem:[%s157 + $0x58] sm:$0xff]
        %v176 = vld [vmem:[%s157 + $0x60] sm:$0xff]
        %v177 = vld [vmem:[%s1] sm:$0xf]
        %v178 = vld [vmem:[%s1 + $0x4] sm:$0xf]
        %v179 = vld [vmem:[%s1 + $0x8] sm:$0xf]
        %v180 = vld [vmem:[%s1 + $0xc] sm:$0xf]
        %v181 = vld [vmem:[%s1 + $0x10] sm:$0x1]
        %v182 = vunpack.c.l.bf16 %v181
        %v183 = vpack.c.bf16 %v165, %v164
        %v184 = vpack.c.bf16 %v167, %v166
        %v185 = vpack.c.bf16 %v169, %v168
        %v186 = vpack.c.bf16 %v171, %v170
        %v187 = vpack.c.bf16 %v173, %v172
        %v188 = vpack.c.bf16 %v175, %v174
        %v189 = vpack.c.bf16 %v176, %v176
        %v190 = vlaneseq
        %v191 = vshrl.u32 %v190, 7
        %v192 = vsub.s32 0, %v191
        %v193 = vrot.slane %v182, %v192
        %v198 = vunpack.c.l.b16 %v177
        %v199 = vunpack.c.l.b16 %v178
        %v200 = vunpack.c.l.b16 %v179
        %v201 = vunpack.c.l.b16 %v180
        %v202 = vpack.c.b16 %v199, %v198
        %v203 = vpack.c.b16 %v201, %v200
        %vm206 = vcmask 261120
        %v208 = vsel %vm206, %v183, 0
        %v211 = vsel %vm206, %v184, 0
        %v214 = vsel %vm206, %v185, 0
        %v217 = vsel %vm206, %v186, 0
        %v220 = vsel %vm206, %v187, 0
        %v223 = vsel %vm206, %v188, 0
        %v226 = vsel %vm206, %v189, 0
        %228 = vmatprep.subr.bf16.mxu0 0
        %229 = vmatpush1.bf16.msra.mxu0 %v202
        %230 = vmatprep.subr.bf16.mxu0 0
        %231 = vmatpush1.bf16.msra.mxu0 %v203
        %232 = vmatprep.subr.bf16.mxu0 0
        %233 = vmatpush1.bf16.msra.mxu0 0
        %234 = vmatprep.subr.bf16.mxu0 0
        %235 = vmatpush1.bf16.msra.mxu0 0
        %236 = vmatprep.subr.bf16.mxu0 0
        %237 = vmatpush1.bf16.msra.mxu0 0
        %238 = vmatprep.subr.bf16.mxu0 0
        %239 = vmatpush1.bf16.msra.mxu0 0
        %240 = vmatprep.subr.bf16.mxu0 0
        %241 = vmatpush1.bf16.msra.mxu0 0
        %242 = vmatprep.subr.bf16.mxu0 0
        %243 = vmatpush1.bf16.msra.mxu0 0
        %244 = vmatprep.subr.bf16.mxu0 0
        %245 = vmatpush1.bf16.msra.mxu0 0
        %246 = vmatprep.subr.bf16.mxu0 0
        %247 = vmatpush1.bf16.msra.mxu0 0
        %248 = vmatprep.subr.bf16.mxu0 0
        %249 = vmatpush1.bf16.msra.mxu0 0
        %250 = vmatprep.subr.bf16.mxu0 0
        %251 = vmatpush1.bf16.msra.mxu0 0
        %252 = vmatprep.subr.bf16.mxu0 0
        %253 = vmatpush1.bf16.msra.mxu0 0
        %254 = vmatprep.subr.bf16.mxu0 0
        %255 = vmatpush1.bf16.msra.mxu0 0
        %256 = vmatprep.subr.bf16.mxu0 0
        %257 = vmatpush1.bf16.msra.mxu0 0
        %258 = vmatprep.subr.bf16.mxu0 0
        %259 = vmatpush1.bf16.msra.mxu0 0
        %260 = vmatprep.mubr.bf16.mxu0 0
        %261 = vmatmul.mubr.bf16.gmra.mrb[0].mxu0 %v208
        %v262 = vpop.f32.mrb[0].mxu0
        %v263 = vadd.f32 %v193, %v262
        %v264 = vpop.f32.mrb[0].mxu0
        %v265 = vpop.f32.mrb[0].mxu0
        %v266 = vadd.f32 %v193, %v265
        %v267 = vpop.f32.mrb[0].mxu0
        %268 = vmatprep.mubr.bf16.mxu0 0
        %269 = vmatmul.mubr.bf16.gmra.mrb[0].mxu0 %v211
        %v270 = vpop.f32.mrb[0].mxu0
        %v271 = vadd.f32 %v193, %v270
        %v272 = vpop.f32.mrb[0].mxu0
        %v273 = vpop.f32.mrb[0].mxu0
        %v274 = vadd.f32 %v193, %v273
        %v275 = vpop.f32.mrb[0].mxu0
        %276 = vmatprep.mubr.bf16.mxu0 0
        %277 = vmatmul.mubr.bf16.gmra.mrb[0].mxu0 %v214
        %v278 = vpop.f32.mrb[0].mxu0
        %v279 = vadd.f32 %v193, %v278
        %v280 = vpop.f32.mrb[0].mxu0
        %v281 = vpop.f32.mrb[0].mxu0
        %v282 = vadd.f32 %v193, %v281
        %v283 = vpop.f32.mrb[0].mxu0
        %284 = vmatprep.mubr.bf16.mxu0 0
        %285 = vmatmul.mubr.bf16.gmra.mrb[0].mxu0 %v217
        %v286 = vpop.f32.mrb[0].mxu0
        %v287 = vadd.f32 %v193, %v286
        %v288 = vpop.f32.mrb[0].mxu0
        %v289 = vpop.f32.mrb[0].mxu0
        %v290 = vadd.f32 %v193, %v289
        %v291 = vpop.f32.mrb[0].mxu0
        %292 = vmatprep.mubr.bf16.mxu0 0
        %293 = vmatmul.mubr.bf16.gmra.mrb[0].mxu0 %v220
        %v294 = vpop.f32.mrb[0].mxu0
        %v295 = vadd.f32 %v193, %v294
        %v296 = vpop.f32.mrb[0].mxu0
        %v297 = vpop.f32.mrb[0].mxu0
        %v298 = vadd.f32 %v193, %v297
        %v299 = vpop.f32.mrb[0].mxu0
        %300 = vmatprep.mubr.bf16.mxu0 0
        %301 = vmatmul.mubr.bf16.gmra.mrb[0].mxu0 %v223
        %v302 = vpop.f32.mrb[0].mxu0
        %v303 = vadd.f32 %v193, %v302
        %v304 = vpop.f32.mrb[0].mxu0
        %v305 = vpop.f32.mrb[0].mxu0
        %v306 = vadd.f32 %v193, %v305
        %v307 = vpop.f32.mrb[0].mxu0
        %308 = vmatprep.mubr.bf16.mxu0 0
        %309 = vmatmul.mubr.bf16.gmra.mrb[0].mxu0 %v226
        %v310 = vpop.f32.mrb[0].mxu0
        %v311 = vadd.f32 %v193, %v310
        %v312 = vpop.f32.mrb[0].mxu0
        %v313 = vpop.f32.mrb[0].mxu0
        %v314 = vpop.f32.mrb[0].mxu0
        %315 = vdwg.mxu0
        %v316 = vmax.f32 %v263, 0.0
        %v317 = vmax.f32 %v266, 0.0
        %v318 = vmax.f32 %v271, 0.0
        %v319 = vmax.f32 %v274, 0.0
        %v320 = vmax.f32 %v279, 0.0
        %v321 = vmax.f32 %v282, 0.0
        %v322 = vmax.f32 %v287, 0.0
        %v323 = vmax.f32 %v290, 0.0
        %v324 = vmax.f32 %v295, 0.0
        %v325 = vmax.f32 %v298, 0.0
        %v326 = vmax.f32 %v303, 0.0
        %v327 = vmax.f32 %v306, 0.0
        %v328 = vmax.f32 %v311, 0.0
        %v329 = vld [vmem:[%s1 + $0x14] sm:$0xf]
        %v330 = vld [vmem:[%s1 + $0x18] sm:$0xf]
        %v331 = vld [vmem:[%s1 + $0x1c] sm:$0xf]
        %v332 = vld [vmem:[%s1 + $0x20] sm:$0xf]
        %v333 = vld [vmem:[%s1 + $0x24] sm:$0xf]
        %v334 = vld [vmem:[%s1 + $0x28] sm:$0xf]
        %v335 = vld [vmem:[%s1 + $0x2c] sm:$0xf]
        %v336 = vld [vmem:[%s1 + $0x30] sm:$0xf]
        %v337 = vld [vmem:[%s1 + $0x34] sm:$0xf]
        %v338 = vld [vmem:[%s1 + $0x38] sm:$0xf]
        %v339 = vld [vmem:[%s1 + $0x3c] sm:$0xf]
        %v340 = vld [vmem:[%s1 + $0x40] sm:$0xf]
        %v341 = vld [vmem:[%s1 + $0x44] sm:$0xf]
        %v342 = vld [vmem:[%s1 + $0x48] sm:$0xf]
        %v343 = vld [vmem:[%s1 + $0x4c] sm:$0xf]
        %v344 = vld [vmem:[%s1 + $0x50] sm:$0xf]
        %v345 = vld [vmem:[%s1 + $0x54] sm:$0x1]
        %v346 = vunpack.c.l.bf16 %v345
        %v347 = vpack.c.bf16 %v317, %v316
        %v348 = vpack.c.bf16 %v319, %v318
        %v349 = vpack.c.bf16 %v321, %v320
        %v350 = vpack.c.bf16 %v323, %v322
        %v351 = vpack.c.bf16 %v325, %v324
        %v352 = vpack.c.bf16 %v327, %v326
        %v353 = vpack.c.bf16 %v328, %v328
        %v354 = vlaneseq
        %v355 = vshrl.u32 %v354, 7
        %v356 = vsub.s32 0, %v355
        %v357 = vrot.slane %v346, %v356
        %v374 = vunpack.c.l.b16 %v329
        %v375 = vunpack.c.l.b16 %v330
        %v376 = vunpack.c.l.b16 %v331
        %v377 = vunpack.c.l.b16 %v332
        %v378 = vunpack.c.l.b16 %v333
        %v379 = vunpack.c.l.b16 %v334
        %v380 = vunpack.c.l.b16 %v335
        %v381 = vunpack.c.l.b16 %v336
        %v382 = vunpack.c.l.b16 %v337
        %v383 = vunpack.c.l.b16 %v338
        %v384 = vunpack.c.l.b16 %v339
        %v385 = vunpack.c.l.b16 %v340
        %v386 = vunpack.c.l.b16 %v341
        %v387 = vunpack.c.l.b16 %v342
        %v388 = vunpack.c.l.b16 %v343
        %v389 = vunpack.c.l.b16 %v344
        %v390 = vpack.c.b16 %v375, %v374
        %v391 = vpack.c.b16 %v377, %v376
        %v392 = vpack.c.b16 %v379, %v378
        %v393 = vpack.c.b16 %v381, %v380
        %v394 = vpack.c.b16 %v383, %v382
        %v395 = vpack.c.b16 %v385, %v384
        %v396 = vpack.c.b16 %v387, %v386
        %v397 = vpack.c.b16 %v389, %v388
        %406 = vmatprep.subr.bf16.mxu0 0
        %407 = vmatpush1.bf16.msra.mxu0 %v390
        %408 = vmatprep.subr.bf16.mxu0 0
        %409 = vmatpush1.bf16.msra.mxu0 %v391
        %410 = vmatprep.subr.bf16.mxu0 0
        %411 = vmatpush1.bf16.msra.mxu0 %v392
        %412 = vmatprep.subr.bf16.mxu0 0
        %413 = vmatpush1.bf16.msra.mxu0 %v393
        %414 = vmatprep.subr.bf16.mxu0 0
        %415 = vmatpush1.bf16.msra.mxu0 %v394
        %416 = vmatprep.subr.bf16.mxu0 0
        %417 = vmatpush1.bf16.msra.mxu0 %v395
        %418 = vmatprep.subr.bf16.mxu0 0
        %419 = vmatpush1.bf16.msra.mxu0 %v396
        %420 = vmatprep.subr.bf16.mxu0 0
        %421 = vmatpush1.bf16.msra.mxu0 %v397
        %422 = vmatprep.subr.bf16.mxu0 0
        %423 = vmatpush1.bf16.msra.mxu0 0
        %424 = vmatprep.subr.bf16.mxu0 0
        %425 = vmatpush1.bf16.msra.mxu0 0
        %426 = vmatprep.subr.bf16.mxu0 0
        %427 = vmatpush1.bf16.msra.mxu0 0
        %428 = vmatprep.subr.bf16.mxu0 0
        %429 = vmatpush1.bf16.msra.mxu0 0
        %430 = vmatprep.subr.bf16.mxu0 0
        %431 = vmatpush1.bf16.msra.mxu0 0
        %432 = vmatprep.subr.bf16.mxu0 0
        %433 = vmatpush1.bf16.msra.mxu0 0
        %434 = vmatprep.subr.bf16.mxu0 0
        %435 = vmatpush1.bf16.msra.mxu0 0
        %436 = vmatprep.subr.bf16.mxu0 0
        %437 = vmatpush1.bf16.msra.mxu0 0
        %438 = vmatprep.mubr.bf16.mxu0 0
        %439 = vmatmul.mubr.bf16.gmra.mrb[0].mxu0 %v347
        %v440 = vpop.f32.mrb[0].mxu0
        %v441 = vadd.f32 %v357, %v440
        %v442 = vpop.f32.mrb[0].mxu0
        %v443 = vpop.f32.mrb[0].mxu0
        %v444 = vadd.f32 %v357, %v443
        %v445 = vpop.f32.mrb[0].mxu0
        %446 = vmatprep.mubr.bf16.mxu0 0
        %447 = vmatmul.mubr.bf16.gmra.mrb[0].mxu0 %v348
        %v448 = vpop.f32.mrb[0].mxu0
        %v449 = vadd.f32 %v357, %v448
        %v450 = vpop.f32.mrb[0].mxu0
        %v451 = vpop.f32.mrb[0].mxu0
        %v452 = vadd.f32 %v357, %v451
        %v453 = vpop.f32.mrb[0].mxu0
        %454 = vmatprep.mubr.bf16.mxu0 0
        %455 = vmatmul.mubr.bf16.gmra.mrb[0].mxu0 %v349
        %v456 = vpop.f32.mrb[0].mxu0
        %v457 = vadd.f32 %v357, %v456
        %v458 = vpop.f32.mrb[0].mxu0
        %v459 = vpop.f32.mrb[0].mxu0
        %v460 = vadd.f32 %v357, %v459
        %v461 = vpop.f32.mrb[0].mxu0
        %462 = vmatprep.mubr.bf16.mxu0 0
        %463 = vmatmul.mubr.bf16.gmra.mrb[0].mxu0 %v350
        %v464 = vpop.f32.mrb[0].mxu0
        %v465 = vadd.f32 %v357, %v464
        %v466 = vpop.f32.mrb[0].mxu0
        %v467 = vpop.f32.mrb[0].mxu0
        %v468 = vadd.f32 %v357, %v467
        %v469 = vpop.f32.mrb[0].mxu0
        %470 = vmatprep.mubr.bf16.mxu0 0
        %471 = vmatmul.mubr.bf16.gmra.mrb[0].mxu0 %v351
        %v472 = vpop.f32.mrb[0].mxu0
        %v473 = vadd.f32 %v357, %v472
        %v474 = vpop.f32.mrb[0].mxu0
        %v475 = vpop.f32.mrb[0].mxu0
        %v476 = vadd.f32 %v357, %v475
        %v477 = vpop.f32.mrb[0].mxu0
        %478 = vmatprep.mubr.bf16.mxu0 0
        %479 = vmatmul.mubr.bf16.gmra.mrb[0].mxu0 %v352
        %v480 = vpop.f32.mrb[0].mxu0
        %v481 = vadd.f32 %v357, %v480
        %v482 = vpop.f32.mrb[0].mxu0
        %v483 = vpop.f32.mrb[0].mxu0
        %v484 = vadd.f32 %v357, %v483
        %v485 = vpop.f32.mrb[0].mxu0
        %486 = vmatprep.mubr.bf16.mxu0 0
        %487 = vmatmul.mubr.bf16.gmra.mrb[0].mxu0 %v353
        %v488 = vpop.f32.mrb[0].mxu0
        %v489 = vadd.f32 %v357, %v488
        %v490 = vpop.f32.mrb[0].mxu0
        %v491 = vpop.f32.mrb[0].mxu0
        %v492 = vpop.f32.mrb[0].mxu0
        %493 = vdwg.mxu0
        %v494 = vmax.f32 %v441, 0.0
        %v495 = vmax.f32 %v444, 0.0
        %v496 = vmax.f32 %v449, 0.0
        %v497 = vmax.f32 %v452, 0.0
        %v498 = vmax.f32 %v457, 0.0
        %v499 = vmax.f32 %v460, 0.0
        %v500 = vmax.f32 %v465, 0.0
        %v501 = vmax.f32 %v468, 0.0
        %v502 = vmax.f32 %v473, 0.0
        %v503 = vmax.f32 %v476, 0.0
        %v504 = vmax.f32 %v481, 0.0
        %v505 = vmax.f32 %v484, 0.0
        %v506 = vmax.f32 %v489, 0.0
        %v507 = vld [vmem:[%s1 + $0x58] sm:$0x1]
        %v508 = vld [vmem:[%s1 + $0x5c] sm:$0x1]
        %v509 = vunpack.c.l.bf16 %v508
        %v510 = vpack.c.bf16 %v495, %v494
        %v511 = vpack.c.bf16 %v497, %v496
        %v512 = vpack.c.bf16 %v499, %v498
        %v513 = vpack.c.bf16 %v501, %v500
        %v514 = vpack.c.bf16 %v503, %v502
        %v515 = vpack.c.bf16 %v505, %v504
        %v516 = vpack.c.bf16 %v506, %v506
        %518 = vset.pattern.permute.xlu0 0
        %519 = vperm.xlu0 %518, %v509
        %v520 = vpop.permute.xlu0 %519
        %522 = vmatprep.subr.bf16.mxu0 0
        %523 = vmatpush1.bf16.xpose.msra.mxu0 %v510
        %524 = vmatprep.subr.bf16.mxu0 0
        %525 = vmatpush1.bf16.xpose.msra.mxu0 %v511
        %526 = vmatprep.subr.bf16.mxu0 0
        %527 = vmatpush1.bf16.xpose.msra.mxu0 %v512
        %528 = vmatprep.subr.bf16.mxu0 0
        %529 = vmatpush1.bf16.xpose.msra.mxu0 %v513
        %530 = vmatprep.subr.bf16.mxu0 0
        %531 = vmatpush1.bf16.xpose.msra.mxu0 %v514
        %532 = vmatprep.subr.bf16.mxu0 0
        %533 = vmatpush1.bf16.xpose.msra.mxu0 %v515
        %534 = vmatprep.subr.bf16.mxu0 0
        %535 = vmatpush1.bf16.xpose.msra.mxu0 %v516
        %536 = vmatprep.subr.bf16.mxu0 0
        %537 = vmatpush1.bf16.xpose.msra.mxu0 0
        %538 = vmatprep.subr.bf16.mxu0 0
        %539 = vmatpush1.bf16.xpose.msra.mxu0 0
        %540 = vmatprep.subr.bf16.mxu0 0
        %541 = vmatpush1.bf16.xpose.msra.mxu0 0
        %542 = vmatprep.subr.bf16.mxu0 0
        %543 = vmatpush1.bf16.xpose.msra.mxu0 0
        %544 = vmatprep.subr.bf16.mxu0 0
        %545 = vmatpush1.bf16.xpose.msra.mxu0 0
        %546 = vmatprep.subr.bf16.mxu0 0
        %547 = vmatpush1.bf16.xpose.msra.mxu0 0
        %548 = vmatprep.subr.bf16.mxu0 0
        %549 = vmatpush1.bf16.xpose.msra.mxu0 0
        %550 = vmatprep.subr.bf16.mxu0 0
        %551 = vmatpush1.bf16.xpose.msra.mxu0 0
        %552 = vmatprep.subr.bf16.mxu0 0
        %553 = vmatpush1.bf16.xpose.msra.mxu0 0
        %554 = vmatprep.mubr.bf16.mxu0 0
        %555 = vmatmul.mubr.bf16.gmra.mrb[0].mxu0 %v507
        %v556 = vpop.f32.mrb[0].mxu0
        %v557 = vadd.f32 %v520, %v556
        %v558 = vpop.f32.mrb[0].mxu0
        %v559 = vpop.f32.mrb[0].mxu0
        %v560 = vpop.f32.mrb[0].mxu0
        %561 = vdwg.mxu0
        %v562 = vxor.u32 %v557, 2147483648
        %v563 = vmul.f32 %v562, 1.442695
        %v564 = vpow.pop %v563
        %v565 = vadd.f32 %v564, 1.0
        %v566 = vrcp.pop %v565
        %v567 = vmul.f32 1.0, %v566
        %vm568 = vcmask 843776
        %569 = vst.msk [vmem:[%s148] sm:$0x1] %vm568, %v567
        %s570 = sand.u32 %s71, 1
        %s571 = scalar_lea.sflag [#allocation3], %s570
        %s572 = sand.u32 %s71, 1
        %s573 = scalar_lea.vmem [#allocation2], %s572
        // Predicated region
        $region29: #{tpu_custom_call.1} parent=27 // pred_check
          %p574 = pneg %p81
        $region30: #{tpu_custom_call.1} parent=27 // pred_check_branch
          %576 = sbr.rel (%p574) target = $region32
        $region31: #{tpu_custom_call.1} parent=27 // pred_region
          %s578 = ssub.s32 16, 16
          %579 = vsyncadd %s571, %s578
          %s580 = smul.addr %s16, 16
          %s581 = scalar_lea.hbm %s2, %s580
          %s583 = sshll.u32 %s573, 4
          %s584 = int_to_ptr.vmem [resolvable:$true] %s583
          %586 = dma.vmem_to_hbm [thread:$0]  %s584, 16, %s581, %s571
        $region32: #{tpu_custom_call.1} parent=27 // pred_fallthru
          _
      $region28: #{tpu_custom_call.1} parent=5 // pred_fallthru
        _
      %p587 = scmp.le.s32.totalorder 2, %s11
      // Predicated region
      $region33: #{tpu_custom_call.1} parent=5 // pred_check
        %p588 = pneg %p587
      $region34: #{tpu_custom_call.1} parent=5 // pred_check_branch
        %590 = sbr.rel (%p588) target = $region36
      $region35: #{tpu_custom_call.1} parent=5 // pred_region
        %s591 = ssub.s32 %s11, 2
        // Predicated region
        $region37: #{tpu_custom_call.1} parent=35 // pred_check
          %p592 = pneg %p87
        $region38: #{tpu_custom_call.1} parent=35 // pred_check_branch
          %594 = sbr.rel (%p592) target = $region40
        $region39: #{tpu_custom_call.1} parent=35 // pred_region
          %s595 = sand.u32 %s72, 1
          %s596 = scalar_lea.sflag [#allocation3], %s595
          %s597 = sand.u32 %s72, 1
          %s598 = scalar_lea.vmem [#allocation2], %s597
          %599 = dma.done %s596, 16
        $region40: #{tpu_custom_call.1} parent=35 // pred_fallthru
          _
      $region36: #{tpu_custom_call.1} parent=5 // pred_fallthru
        _
    $region6: #{tpu_custom_call.1} parent=1 // loop_footer
      %s15 = sadd.s32 1, %s11
    $region7: #{tpu_custom_call.1} parent=1 // loop_footer_branch
      %10 = sbr.rel target = $region3
    $region8: #{tpu_custom_call.1} parent=1 // loop_exit
      _
    %600 = vsyncpa [#allocation3], 1
    %s601 = scalar_lea.sflag [#allocation3], 1
    %602 = vsyncpa %s601, 1

</llo_original>
